<compile_context>
chip_gen: v7x
topology: tpu7x:2x2x1
jax: 0.10.0
libtpu: 0.0.40
codegen_flags: <defaults>
</compile_context>

<pallas_src>
import functools

import jax
import jax.numpy as jnp
from jax.experimental import pallas as pl
from jax.experimental.pallas import tpu as pltpu


def _round_up(n, m):
    return ((n + m - 1) // m) * m


def _dense_block_kernel(x_ref, pos_ref, scale_ref, shift_ref, w_ref, b_ref,
                        o_ref, feat_ref, *, C_in, G, num_layers, L, Lp,
                        compute_dtype):
    """One grid step: Bt examples folded into lanes, full dense block in VMEM."""
    W = x_ref.shape[-1]                       # Bt * Lp (lane-dense, multiple of 128)
    pos = pos_ref[...]                        # (1, W) int32 position within example
    padded = (Lp != L)

    # Conv zero-padding + no-cross-example-leak masks (computed/broadcast once).
    mask_l = jnp.broadcast_to(pos >= 1, (G, W))
    mask_r = jnp.broadcast_to(pos <= L - 2, (G, W))
    zeros_gw = jnp.zeros((G, W), jnp.float32)
    if padded:
        valid_gw = jnp.broadcast_to(pos < L, (G, W))

    # Input features occupy rows [0, C_in) of the resident feature buffer.
    x = x_ref[...]                            # (C_in, W)
    feat_ref[pl.ds(0, C_in), :] = x.astype(jnp.float32)
    o_ref[pl.ds(0, C_in), :] = x.astype(o_ref.dtype)

    for i in range(num_layers):
        C_i = C_in + i * G
        scale = scale_ref[i, :C_i, :]         # (C_i, 1) = gamma / sqrt(var + eps)
        shift = shift_ref[i, :C_i, :]         # (C_i, 1) = beta - mean * scale
        w = w_ref[i, :, :C_i]                 # (3G, C_i), taps stacked on rows
        bias = b_ref[i]                       # (G, 1)

        # BatchNorm1d (inference affine) + ReLU on the dense-connectivity prefix.
        prev = feat_ref[pl.ds(0, C_i), :]     # (C_i, W) f32
        act = jnp.maximum(prev * scale + shift, 0.0).astype(compute_dtype)

        # Conv1d(k=3, stride=1, pad=1): all three taps in ONE MXU matmul.
        y = jnp.dot(w, act, preferred_element_type=jnp.float32)   # (3G, W)
        y0 = y[0:G]                           # needs act[l-1]
        y1 = y[G:2 * G]                       # needs act[l]
        y2 = y[2 * G:3 * G]                   # needs act[l+1]

        # Shift the small G-row results (XLU roll) instead of the C_i-row input.
        left = jnp.where(mask_l, pltpu.roll(y0, 1, axis=1), zeros_gw)
        right = jnp.where(mask_r, pltpu.roll(y2, W - 1, axis=1), zeros_gw)
        out = y1 + left + right + bias        # (G, W) f32

        if padded:                            # keep padded columns exactly zero
            out = jnp.where(valid_gw, out, zeros_gw)

        row = C_in + i * G
        feat_ref[pl.ds(row, G), :] = out                      # grow features
        o_ref[pl.ds(row, G), :] = out.astype(o_ref.dtype)     # lane-dense store


def dense_block_forward(x, params, *, eps=1e-5, interpret=False):
    """Pallas DenseBlock forward.

    x:      (B, C_in, L)
    params: list of per-layer dicts with PyTorch-shaped tensors:
              gamma, beta, mean, var : (C_i,)       BatchNorm1d affine / running stats
              weight                 : (G, C_i, 3)  Conv1d weight
              bias                   : (G,)         Conv1d bias
            where C_i = C_in + i * G.
    returns (B, C_in + num_layers * G, L)
    """
    B, C_in, L = x.shape
    num_layers = len(params)
    G = params[0]["weight"].shape[0]
    C_total = C_in + num_layers * G
    C_max = C_in + (num_layers - 1) * G

    compute_dtype = jnp.bfloat16 if x.dtype == jnp.bfloat16 else jnp.float32
    itemsize = jnp.dtype(x.dtype).itemsize

    # Per-example lane padding (multiple of 128), then fold Bt examples into
    # lanes so the matmul RHS is >= 256 lanes wide when possible.
    Lp = _round_up(max(L, 1), 128)
    Bt = max(1, min(B, 512 // Lp)) if Lp <= 512 else 1

    def vmem_est(bt):
        w = bt * Lp
        return (2 * C_in * w * itemsize           # input block (double-buffered)
                + 2 * C_total * w * itemsize      # output block (double-buffered)
                + C_total * w * 4                 # resident f32 feature scratch
                + 8 * C_max * w * 4               # act / matmul temporaries headroom
                + 2 * num_layers * (2 * C_max + 3 * G * C_max + G) * 4
                + 2 * w * 4)

    while Bt > 1 and vmem_est(Bt) > 40 * 2**20:
        Bt -= 1
    W = Bt * Lp
    Bp = _round_up(B, Bt)
    nb = Bp // Bt

    # Pad (batch, length) and fold Bt examples into the lane dimension.
    xp = jnp.pad(x, ((0, Bp - B), (0, 0), (0, Lp - L)))
    x_folded = (xp.reshape(nb, Bt, C_in, Lp)
                  .transpose(0, 2, 1, 3)
                  .reshape(nb, C_in, W))

    # Position-within-example for every lane (drives conv-pad / fold masks).
    pos = jnp.tile(jnp.arange(Lp, dtype=jnp.int32), Bt).reshape(1, W)

    # Consolidated parameters: 4 packed arrays instead of 4 per layer.
    scale_all = jnp.zeros((num_layers, C_max, 1), jnp.float32)
    shift_all = jnp.zeros((num_layers, C_max, 1), jnp.float32)
    w_all = jnp.zeros((num_layers, 3 * G, C_max), compute_dtype)
    b_all = jnp.zeros((num_layers, G, 1), jnp.float32)
    for i, p in enumerate(params):
        C_i = C_in + i * G
        scale = (p["gamma"].astype(jnp.float32)
                 / jnp.sqrt(p["var"].astype(jnp.float32) + eps))
        shift = p["beta"].astype(jnp.float32) - p["mean"].astype(jnp.float32) * scale
        # Stack the 3 taps on rows: rows [0:G]=tap(l-1), [G:2G]=tap(l), [2G:3G]=tap(l+1).
        w_stk = jnp.transpose(p["weight"], (2, 0, 1)).reshape(3 * G, C_i)
        scale_all = scale_all.at[i, :C_i, 0].set(scale)
        shift_all = shift_all.at[i, :C_i, 0].set(shift)
        w_all = w_all.at[i, :, :C_i].set(w_stk.astype(compute_dtype))
        b_all = b_all.at[i, :, 0].set(p["bias"].astype(jnp.float32))

    kernel = functools.partial(
        _dense_block_kernel, C_in=C_in, G=G, num_layers=num_layers,
        L=L, Lp=Lp, compute_dtype=compute_dtype)

    vmem_limit = int(min(max(2 * vmem_est(Bt), 32 * 2**20), 48 * 2**20))

    out = pl.pallas_call(
        kernel,
        grid=(nb,),
        in_specs=[
            pl.BlockSpec((None, C_in, W), lambda g: (g, 0, 0)),
            pl.BlockSpec((1, W), lambda g: (0, 0)),
            pl.BlockSpec((num_layers, C_max, 1), lambda g: (0, 0, 0)),
            pl.BlockSpec((num_layers, C_max, 1), lambda g: (0, 0, 0)),
            pl.BlockSpec((num_layers, 3 * G, C_max), lambda g: (0, 0, 0)),
            pl.BlockSpec((num_layers, G, 1), lambda g: (0, 0, 0)),
        ],
        out_specs=pl.BlockSpec((None, C_total, W), lambda g: (g, 0, 0)),
        out_shape=jax.ShapeDtypeStruct((nb, C_total, W), x.dtype),
        scratch_shapes=[pltpu.VMEM((C_total, W), jnp.float32)],
        compiler_params=pltpu.CompilerParams(
            dimension_semantics=("parallel",),
            vmem_limit_bytes=vmem_limit),
        interpret=interpret,
    )(x_folded, pos, scale_all, shift_all, w_all, b_all)

    # Un-fold batch from lanes and drop the lane / batch padding (cheap XLA copy).
    out = (out.reshape(nb, C_total, Bt, Lp)
              .transpose(0, 2, 1, 3)
              .reshape(Bp, C_total, Lp))
    return out[:B, :, :L]


def _reference(x, params, eps=1e-5):
    """Pure-JAX reference mirroring the PyTorch module (eval-mode BN)."""
    feats = x
    for p in params:
        inv = p["gamma"] / jnp.sqrt(p["var"] + eps)
        act = jax.nn.relu(
            (feats - p["mean"][None, :, None]) * inv[None, :, None]
            + p["beta"][None, :, None]
        )
        out = jax.lax.conv_general_dilated(
            act, p["weight"], window_strides=(1,), padding=((1, 1),),
            dimension_numbers=("NCH", "OIH", "NCH"),
        ) + p["bias"][None, :, None]
        feats = jnp.concatenate([feats, out], axis=1)
    return feats


if __name__ == "__main__":
    key = jax.random.PRNGKey(0)

    B, C_in, L = 2, 8, 16          # batch, in_channels, sequence length
    G, num_layers = 8, 3           # growth_rate, num_layers  -> C_total = 32

    key, kx = jax.random.split(key)
    x = jax.random.normal(kx, (B, C_in, L), dtype=jnp.float32)

    params = []
    for i in range(num_layers):
        C_i = C_in + i * G
        key, k1, k2, k3, k4, k5, k6 = jax.random.split(key, 7)
        params.append(dict(
            gamma=jax.random.uniform(k1, (C_i,), minval=0.5, maxval=1.5),
            beta=0.1 * jax.random.normal(k2, (C_i,)),
            mean=0.1 * jax.random.normal(k3, (C_i,)),
            var=jax.random.uniform(k4, (C_i,), minval=0.5, maxval=1.5),
            weight=jax.random.normal(k5, (G, C_i, 3)) / (3.0 * C_i) ** 0.5,
            bias=0.1 * jax.random.normal(k6, (G,)),
        ))

    out = dense_block_forward(x, params)
    out = jax.block_until_ready(out)

    ref = _reference(x, params)
    assert out.shape == (B, C_in + num_layers * G, L), out.shape
    max_err = float(jnp.max(jnp.abs(out - ref)))
    assert jnp.allclose(out, ref, rtol=1e-3, atol=1e-3), max_err

    print("KERNEL_OK")
</pallas_src>

<mosaic_0001>
module attributes {stable_mosaic.version = 11 : i64} {
  func.func @_dense_block_kernel(%arg0: i32, %arg1: memref<1x8x256xf32, #tpu.memory_space<vmem>>, %arg2: memref<1x256xi32, #tpu.memory_space<vmem>>, %arg3: memref<3x24x1xf32, #tpu.memory_space<vmem>>, %arg4: memref<3x24x1xf32, #tpu.memory_space<vmem>>, %arg5: memref<3x24x24xf32, #tpu.memory_space<vmem>>, %arg6: memref<3x8x1xf32, #tpu.memory_space<vmem>>, %arg7: memref<1x32x256xf32, #tpu.memory_space<vmem>>, %arg8: memref<32x256xf32, #tpu.memory_space<vmem>>) attributes {dimension_semantics = [#tpu.dimension_semantics<parallel>], iteration_bounds = array<i64: 1>, scalar_prefetch = 0 : i64, scratch_operands = 1 : i64, tpu.core_type = #tpu.core_type<tc>, window_params = [{transform_indices = @transform_0, window_bounds = array<i64: 1, 8, 256>}, {pipeline_mode = #tpu.pipeline_mode<synchronous>, transform_indices = @transform_1, window_bounds = array<i64: 1, 256>}, {pipeline_mode = #tpu.pipeline_mode<synchronous>, transform_indices = @transform_2, window_bounds = array<i64: 3, 24, 1>}, {pipeline_mode = #tpu.pipeline_mode<synchronous>, transform_indices = @transform_3, window_bounds = array<i64: 3, 24, 1>}, {pipeline_mode = #tpu.pipeline_mode<synchronous>, transform_indices = @transform_4, window_bounds = array<i64: 3, 24, 24>}, {pipeline_mode = #tpu.pipeline_mode<synchronous>, transform_indices = @transform_5, window_bounds = array<i64: 3, 8, 1>}, {transform_indices = @transform_6, window_bounds = array<i64: 1, 32, 256>}]} {
    %c0 = arith.constant 0 : index
    %c0_0 = arith.constant 0 : index
    %0 = vector.load %arg2[%c0, %c0_0] : memref<1x256xi32, #tpu.memory_space<vmem>>, vector<1x256xi32>
    %c1_i32 = arith.constant 1 : i32
    %1 = vector.broadcast %c1_i32 : i32 to vector<1x256xi32>
    %2 = arith.cmpi sge, %0, %1 : vector<1x256xi32>
    %3 = vector.shape_cast %2 : vector<1x256xi1> to vector<1x256xi1>
    %4 = vector.broadcast %3 : vector<1x256xi1> to vector<8x256xi1>
    %c14_i32 = arith.constant 14 : i32
    %5 = vector.broadcast %c14_i32 : i32 to vector<1x256xi32>
    %6 = arith.cmpi sle, %0, %5 : vector<1x256xi32>
    %7 = vector.shape_cast %6 : vector<1x256xi1> to vector<1x256xi1>
    %8 = vector.broadcast %7 : vector<1x256xi1> to vector<8x256xi1>
    %cst = arith.constant 0.000000e+00 : f32
    %9 = vector.broadcast %cst : f32 to vector<8x256xf32>
    %c16_i32 = arith.constant 16 : i32
    %10 = vector.broadcast %c16_i32 : i32 to vector<1x256xi32>
    %11 = arith.cmpi slt, %0, %10 : vector<1x256xi32>
    %12 = vector.shape_cast %11 : vector<1x256xi1> to vector<1x256xi1>
    %13 = vector.broadcast %12 : vector<1x256xi1> to vector<8x256xi1>
    %c0_1 = arith.constant 0 : index
    %c0_2 = arith.constant 0 : index
    %c0_3 = arith.constant 0 : index
    %14 = vector.load %arg1[%c0_1, %c0_2, %c0_3] : memref<1x8x256xf32, #tpu.memory_space<vmem>>, vector<1x8x256xf32>
    %15 = vector.shape_cast %14 : vector<1x8x256xf32> to vector<8x256xf32>
    %c0_4 = arith.constant 0 : index
    %c0_5 = arith.constant 0 : index
    %16 = vector.load %arg8[%c0_4, %c0_5] : memref<32x256xf32, #tpu.memory_space<vmem>>, vector<8x256xf32>
    tpu.vector_store %arg8[%c0_4, %c0_5], %15 {strides = array<i32>} : memref<32x256xf32, #tpu.memory_space<vmem>>, vector<8x256xf32>,
    %c0_6 = arith.constant 0 : index
    %c0_7 = arith.constant 0 : index
    %c0_8 = arith.constant 0 : index
    %17 = vector.load %arg7[%c0_6, %c0_7, %c0_8] : memref<1x32x256xf32, #tpu.memory_space<vmem>>, vector<1x8x256xf32>
    %18 = vector.shape_cast %17 : vector<1x8x256xf32> to vector<8x256xf32>
    %19 = vector.shape_cast %15 : vector<8x256xf32> to vector<1x8x256xf32>
    tpu.vector_store %arg7[%c0_6, %c0_7, %c0_8], %19 {strides = array<i32>} : memref<1x32x256xf32, #tpu.memory_space<vmem>>, vector<1x8x256xf32>,
    %c0_9 = arith.constant 0 : index
    %c0_10 = arith.constant 0 : index
    %c0_11 = arith.constant 0 : index
    %20 = vector.load %arg3[%c0_9, %c0_10, %c0_11] : memref<3x24x1xf32, #tpu.memory_space<vmem>>, vector<1x8x1xf32>
    %21 = vector.shape_cast %20 : vector<1x8x1xf32> to vector<8x1xf32>
    %c0_12 = arith.constant 0 : index
    %c0_13 = arith.constant 0 : index
    %c0_14 = arith.constant 0 : index
    %22 = vector.load %arg4[%c0_12, %c0_13, %c0_14] : memref<3x24x1xf32, #tpu.memory_space<vmem>>, vector<1x8x1xf32>
    %23 = vector.shape_cast %22 : vector<1x8x1xf32> to vector<8x1xf32>
    %c0_15 = arith.constant 0 : index
    %c0_16 = arith.constant 0 : index
    %c0_17 = arith.constant 0 : index
    %24 = vector.load %arg5[%c0_15, %c0_16, %c0_17] : memref<3x24x24xf32, #tpu.memory_space<vmem>>, vector<1x24x8xf32>
    %25 = vector.shape_cast %24 : vector<1x24x8xf32> to vector<24x8xf32>
    %c0_18 = arith.constant 0 : index
    %c0_19 = arith.constant 0 : index
    %c0_20 = arith.constant 0 : index
    %26 = vector.load %arg6[%c0_18, %c0_19, %c0_20] : memref<3x8x1xf32, #tpu.memory_space<vmem>>, vector<1x8x1xf32>
    %27 = vector.shape_cast %26 : vector<1x8x1xf32> to vector<8x1xf32>
    %c0_21 = arith.constant 0 : index
    %c0_22 = arith.constant 0 : index
    %28 = vector.load %arg8[%c0_21, %c0_22] : memref<32x256xf32, #tpu.memory_space<vmem>>, vector<8x256xf32>
    %29 = vector.broadcast %21 : vector<8x1xf32> to vector<8x256xf32>
    %30 = arith.mulf %28, %29 : vector<8x256xf32>
    %31 = vector.broadcast %23 : vector<8x1xf32> to vector<8x256xf32>
    %32 = arith.addf %30, %31 : vector<8x256xf32>
    %cst_23 = arith.constant 0.000000e+00 : f32
    %33 = vector.broadcast %cst_23 : f32 to vector<8x256xf32>
    %34 = arith.maximumf %32, %33 : vector<8x256xf32>
    %cst_24 = arith.constant dense<0.000000e+00> : vector<24x256xf32>
    %35 = tpu.matmul %25, %34, %cst_24 {dimension_numbers = #tpu.dot_dimension_numbers<[1], [0], [0], [1], [0, 0, 1, 1], [], []>} : vector<24x8xf32>, vector<8x256xf32>, vector<24x256xf32> -> vector<24x256xf32>
    %36 = vector.extract_strided_slice %35 {offsets = [0, 0], sizes = [8, 256], strides = [1, 1]} : vector<24x256xf32> to vector<8x256xf32>
    %37 = vector.extract_strided_slice %35 {offsets = [8, 0], sizes = [8, 256], strides = [1, 1]} : vector<24x256xf32> to vector<8x256xf32>
    %38 = vector.extract_strided_slice %35 {offsets = [16, 0], sizes = [8, 256], strides = [1, 1]} : vector<24x256xf32> to vector<8x256xf32>
    %c1_i32_25 = arith.constant 1 : i32
    %39 = tpu.dynamic_rotate %36 by %c1_i32_25 dim 1 : vector<8x256xf32>, i32 -> vector<8x256xf32>
    %40 = arith.select %4, %39, %9 : vector<8x256xi1>, vector<8x256xf32>
    %c255_i32 = arith.constant 255 : i32
    %41 = tpu.dynamic_rotate %38 by %c255_i32 dim 1 : vector<8x256xf32>, i32 -> vector<8x256xf32>
    %42 = arith.select %8, %41, %9 : vector<8x256xi1>, vector<8x256xf32>
    %43 = arith.addf %37, %40 : vector<8x256xf32>
    %44 = arith.addf %43, %42 : vector<8x256xf32>
    %45 = vector.broadcast %27 : vector<8x1xf32> to vector<8x256xf32>
    %46 = arith.addf %44, %45 : vector<8x256xf32>
    %47 = arith.select %13, %46, %9 : vector<8x256xi1>, vector<8x256xf32>
    %c8 = arith.constant 8 : index
    %c0_26 = arith.constant 0 : index
    %48 = vector.load %arg8[%c8, %c0_26] : memref<32x256xf32, #tpu.memory_space<vmem>>, vector<8x256xf32>
    tpu.vector_store %arg8[%c8, %c0_26], %47 {strides = array<i32>} : memref<32x256xf32, #tpu.memory_space<vmem>>, vector<8x256xf32>,
    %c0_27 = arith.constant 0 : index
    %c8_28 = arith.constant 8 : index
    %c0_29 = arith.constant 0 : index
    %49 = vector.load %arg7[%c0_27, %c8_28, %c0_29] : memref<1x32x256xf32, #tpu.memory_space<vmem>>, vector<1x8x256xf32>
    %50 = vector.shape_cast %49 : vector<1x8x256xf32> to vector<8x256xf32>
    %51 = vector.shape_cast %47 : vector<8x256xf32> to vector<1x8x256xf32>
    tpu.vector_store %arg7[%c0_27, %c8_28, %c0_29], %51 {strides = array<i32>} : memref<1x32x256xf32, #tpu.memory_space<vmem>>, vector<1x8x256xf32>,
    %c1 = arith.constant 1 : index
    %c0_30 = arith.constant 0 : index
    %c0_31 = arith.constant 0 : index
    %52 = vector.load %arg3[%c1, %c0_30, %c0_31] : memref<3x24x1xf32, #tpu.memory_space<vmem>>, vector<1x16x1xf32>
    %53 = vector.shape_cast %52 : vector<1x16x1xf32> to vector<16x1xf32>
    %c1_32 = arith.constant 1 : index
    %c0_33 = arith.constant 0 : index
    %c0_34 = arith.constant 0 : index
    %54 = vector.load %arg4[%c1_32, %c0_33, %c0_34] : memref<3x24x1xf32, #tpu.memory_space<vmem>>, vector<1x16x1xf32>
    %55 = vector.shape_cast %54 : vector<1x16x1xf32> to vector<16x1xf32>
    %c1_35 = arith.constant 1 : index
    %c0_36 = arith.constant 0 : index
    %c0_37 = arith.constant 0 : index
    %56 = vector.load %arg5[%c1_35, %c0_36, %c0_37] : memref<3x24x24xf32, #tpu.memory_space<vmem>>, vector<1x24x16xf32>
    %57 = vector.shape_cast %56 : vector<1x24x16xf32> to vector<24x16xf32>
    %c1_38 = arith.constant 1 : index
    %c0_39 = arith.constant 0 : index
    %c0_40 = arith.constant 0 : index
    %58 = vector.load %arg6[%c1_38, %c0_39, %c0_40] : memref<3x8x1xf32, #tpu.memory_space<vmem>>, vector<1x8x1xf32>
    %59 = vector.shape_cast %58 : vector<1x8x1xf32> to vector<8x1xf32>
    %c0_41 = arith.constant 0 : index
    %c0_42 = arith.constant 0 : index
    %60 = vector.load %arg8[%c0_41, %c0_42] : memref<32x256xf32, #tpu.memory_space<vmem>>, vector<16x256xf32>
    %61 = vector.broadcast %53 : vector<16x1xf32> to vector<16x256xf32>
    %62 = arith.mulf %60, %61 : vector<16x256xf32>
    %63 = vector.broadcast %55 : vector<16x1xf32> to vector<16x256xf32>
    %64 = arith.addf %62, %63 : vector<16x256xf32>
    %cst_43 = arith.constant 0.000000e+00 : f32
    %65 = vector.broadcast %cst_43 : f32 to vector<16x256xf32>
    %66 = arith.maximumf %64, %65 : vector<16x256xf32>
    %cst_44 = arith.constant dense<0.000000e+00> : vector<24x256xf32>
    %67 = tpu.matmul %57, %66, %cst_44 {dimension_numbers = #tpu.dot_dimension_numbers<[1], [0], [0], [1], [0, 0, 1, 1], [], []>} : vector<24x16xf32>, vector<16x256xf32>, vector<24x256xf32> -> vector<24x256xf32>
    %68 = vector.extract_strided_slice %67 {offsets = [0, 0], sizes = [8, 256], strides = [1, 1]} : vector<24x256xf32> to vector<8x256xf32>
    %69 = vector.extract_strided_slice %67 {offsets = [8, 0], sizes = [8, 256], strides = [1, 1]} : vector<24x256xf32> to vector<8x256xf32>
    %70 = vector.extract_strided_slice %67 {offsets = [16, 0], sizes = [8, 256], strides = [1, 1]} : vector<24x256xf32> to vector<8x256xf32>
    %c1_i32_45 = arith.constant 1 : i32
    %71 = tpu.dynamic_rotate %68 by %c1_i32_45 dim 1 : vector<8x256xf32>, i32 -> vector<8x256xf32>
    %72 = arith.select %4, %71, %9 : vector<8x256xi1>, vector<8x256xf32>
    %c255_i32_46 = arith.constant 255 : i32
    %73 = tpu.dynamic_rotate %70 by %c255_i32_46 dim 1 : vector<8x256xf32>, i32 -> vector<8x256xf32>
    %74 = arith.select %8, %73, %9 : vector<8x256xi1>, vector<8x256xf32>
    %75 = arith.addf %69, %72 : vector<8x256xf32>
    %76 = arith.addf %75, %74 : vector<8x256xf32>
    %77 = vector.broadcast %59 : vector<8x1xf32> to vector<8x256xf32>
    %78 = arith.addf %76, %77 : vector<8x256xf32>
    %79 = arith.select %13, %78, %9 : vector<8x256xi1>, vector<8x256xf32>
    %c16 = arith.constant 16 : index
    %c0_47 = arith.constant 0 : index
    %80 = vector.load %arg8[%c16, %c0_47] : memref<32x256xf32, #tpu.memory_space<vmem>>, vector<8x256xf32>
    tpu.vector_store %arg8[%c16, %c0_47], %79 {strides = array<i32>} : memref<32x256xf32, #tpu.memory_space<vmem>>, vector<8x256xf32>,
    %c0_48 = arith.constant 0 : index
    %c16_49 = arith.constant 16 : index
    %c0_50 = arith.constant 0 : index
    %81 = vector.load %arg7[%c0_48, %c16_49, %c0_50] : memref<1x32x256xf32, #tpu.memory_space<vmem>>, vector<1x8x256xf32>
    %82 = vector.shape_cast %81 : vector<1x8x256xf32> to vector<8x256xf32>
    %83 = vector.shape_cast %79 : vector<8x256xf32> to vector<1x8x256xf32>
    tpu.vector_store %arg7[%c0_48, %c16_49, %c0_50], %83 {strides = array<i32>} : memref<1x32x256xf32, #tpu.memory_space<vmem>>, vector<1x8x256xf32>,
    %c2 = arith.constant 2 : index
    %c0_51 = arith.constant 0 : index
    %c0_52 = arith.constant 0 : index
    %84 = vector.load %arg3[%c2, %c0_51, %c0_52] : memref<3x24x1xf32, #tpu.memory_space<vmem>>, vector<1x24x1xf32>
    %85 = vector.shape_cast %84 : vector<1x24x1xf32> to vector<24x1xf32>
    %c2_53 = arith.constant 2 : index
    %c0_54 = arith.constant 0 : index
    %c0_55 = arith.constant 0 : index
    %86 = vector.load %arg4[%c2_53, %c0_54, %c0_55] : memref<3x24x1xf32, #tpu.memory_space<vmem>>, vector<1x24x1xf32>
    %87 = vector.shape_cast %86 : vector<1x24x1xf32> to vector<24x1xf32>
    %c2_56 = arith.constant 2 : index
    %c0_57 = arith.constant 0 : index
    %c0_58 = arith.constant 0 : index
    %88 = vector.load %arg5[%c2_56, %c0_57, %c0_58] : memref<3x24x24xf32, #tpu.memory_space<vmem>>, vector<1x24x24xf32>
    %89 = vector.shape_cast %88 : vector<1x24x24xf32> to vector<24x24xf32>
    %c2_59 = arith.constant 2 : index
    %c0_60 = arith.constant 0 : index
    %c0_61 = arith.constant 0 : index
    %90 = vector.load %arg6[%c2_59, %c0_60, %c0_61] : memref<3x8x1xf32, #tpu.memory_space<vmem>>, vector<1x8x1xf32>
    %91 = vector.shape_cast %90 : vector<1x8x1xf32> to vector<8x1xf32>
    %c0_62 = arith.constant 0 : index
    %c0_63 = arith.constant 0 : index
    %92 = vector.load %arg8[%c0_62, %c0_63] : memref<32x256xf32, #tpu.memory_space<vmem>>, vector<24x256xf32>
    %93 = vector.broadcast %85 : vector<24x1xf32> to vector<24x256xf32>
    %94 = arith.mulf %92, %93 : vector<24x256xf32>
    %95 = vector.broadcast %87 : vector<24x1xf32> to vector<24x256xf32>
    %96 = arith.addf %94, %95 : vector<24x256xf32>
    %cst_64 = arith.constant 0.000000e+00 : f32
    %97 = vector.broadcast %cst_64 : f32 to vector<24x256xf32>
    %98 = arith.maximumf %96, %97 : vector<24x256xf32>
    %cst_65 = arith.constant dense<0.000000e+00> : vector<24x256xf32>
    %99 = tpu.matmul %89, %98, %cst_65 {dimension_numbers = #tpu.dot_dimension_numbers<[1], [0], [0], [1], [0, 0, 1, 1], [], []>} : vector<24x24xf32>, vector<24x256xf32>, vector<24x256xf32> -> vector<24x256xf32>
    %100 = vector.extract_strided_slice %99 {offsets = [0, 0], sizes = [8, 256], strides = [1, 1]} : vector<24x256xf32> to vector<8x256xf32>
    %101 = vector.extract_strided_slice %99 {offsets = [8, 0], sizes = [8, 256], strides = [1, 1]} : vector<24x256xf32> to vector<8x256xf32>
    %102 = vector.extract_strided_slice %99 {offsets = [16, 0], sizes = [8, 256], strides = [1, 1]} : vector<24x256xf32> to vector<8x256xf32>
    %c1_i32_66 = arith.constant 1 : i32
    %103 = tpu.dynamic_rotate %100 by %c1_i32_66 dim 1 : vector<8x256xf32>, i32 -> vector<8x256xf32>
    %104 = arith.select %4, %103, %9 : vector<8x256xi1>, vector<8x256xf32>
    %c255_i32_67 = arith.constant 255 : i32
    %105 = tpu.dynamic_rotate %102 by %c255_i32_67 dim 1 : vector<8x256xf32>, i32 -> vector<8x256xf32>
    %106 = arith.select %8, %105, %9 : vector<8x256xi1>, vector<8x256xf32>
    %107 = arith.addf %101, %104 : vector<8x256xf32>
    %108 = arith.addf %107, %106 : vector<8x256xf32>
    %109 = vector.broadcast %91 : vector<8x1xf32> to vector<8x256xf32>
    %110 = arith.addf %108, %109 : vector<8x256xf32>
    %111 = arith.select %13, %110, %9 : vector<8x256xi1>, vector<8x256xf32>
    %c24 = arith.constant 24 : index
    %c0_68 = arith.constant 0 : index
    %112 = vector.load %arg8[%c24, %c0_68] : memref<32x256xf32, #tpu.memory_space<vmem>>, vector<8x256xf32>
    tpu.vector_store %arg8[%c24, %c0_68], %111 {strides = array<i32>} : memref<32x256xf32, #tpu.memory_space<vmem>>, vector<8x256xf32>,
    %c0_69 = arith.constant 0 : index
    %c24_70 = arith.constant 24 : index
    %c0_71 = arith.constant 0 : index
    %113 = vector.load %arg7[%c0_69, %c24_70, %c0_71] : memref<1x32x256xf32, #tpu.memory_space<vmem>>, vector<1x8x256xf32>
    %114 = vector.shape_cast %113 : vector<1x8x256xf32> to vector<8x256xf32>
    %115 = vector.shape_cast %111 : vector<8x256xf32> to vector<1x8x256xf32>
    tpu.vector_store %arg7[%c0_69, %c24_70, %c0_71], %115 {strides = array<i32>} : memref<1x32x256xf32, #tpu.memory_space<vmem>>, vector<1x8x256xf32>,
    return
  }
  func.func @transform_0(%arg0: i32) -> (i32, i32, i32) {
    %c0_i32 = arith.constant 0 : i32
    %c0_i32_0 = arith.constant 0 : i32
    %c0_i32_1 = arith.constant 0 : i32
    return %arg0, %c0_i32, %c0_i32_0 : i32, i32, i32
  }
  func.func @transform_1(%arg0: i32) -> (i32, i32) {
    %c0_i32 = arith.constant 0 : i32
    %c0_i32_0 = arith.constant 0 : i32
    %c0_i32_1 = arith.constant 0 : i32
    return %c0_i32, %c0_i32_0 : i32, i32
  }
  func.func @transform_2(%arg0: i32) -> (i32, i32, i32) {
    %c0_i32 = arith.constant 0 : i32
    %c0_i32_0 = arith.constant 0 : i32
    %c0_i32_1 = arith.constant 0 : i32
    %c0_i32_2 = arith.constant 0 : i32
    return %c0_i32, %c0_i32_0, %c0_i32_1 : i32, i32, i32
  }
  func.func @transform_3(%arg0: i32) -> (i32, i32, i32) {
    %c0_i32 = arith.constant 0 : i32
    %c0_i32_0 = arith.constant 0 : i32
    %c0_i32_1 = arith.constant 0 : i32
    %c0_i32_2 = arith.constant 0 : i32
    return %c0_i32, %c0_i32_0, %c0_i32_1 : i32, i32, i32
  }
  func.func @transform_4(%arg0: i32) -> (i32, i32, i32) {
    %c0_i32 = arith.constant 0 : i32
    %c0_i32_0 = arith.constant 0 : i32
    %c0_i32_1 = arith.constant 0 : i32
    %c0_i32_2 = arith.constant 0 : i32
    return %c0_i32, %c0_i32_0, %c0_i32_1 : i32, i32, i32
  }
  func.func @transform_5(%arg0: i32) -> (i32, i32, i32) {
    %c0_i32 = arith.constant 0 : i32
    %c0_i32_0 = arith.constant 0 : i32
    %c0_i32_1 = arith.constant 0 : i32
    %c0_i32_2 = arith.constant 0 : i32
    return %c0_i32, %c0_i32_0, %c0_i32_1 : i32, i32, i32
  }
  func.func @transform_6(%arg0: i32) -> (i32, i32, i32) {
    %c0_i32 = arith.constant 0 : i32
    %c0_i32_0 = arith.constant 0 : i32
    %c0_i32_1 = arith.constant 0 : i32
    return %arg0, %c0_i32, %c0_i32_0 : i32, i32, i32
  }
}

</mosaic_0001>

<llo_original>
// kernel: tpu_custom_call.1
$region0: #{tpu_custom_call.1}
  #allocation0 [shape = 'u32[]', space=smem, size = 0x4, offset = 0x4, fixed_abs, tag = 'smem constant byte address 0x4 - core index']
  #allocation1 [shape = 'u32[144,128]{1,0:T(1,128)}', space=vmem, size = 0x12000, scoped, tag = 'internal scratch']
  #allocation2 [shape = 'f32[32,256]{1,0:T(8,128)}', space=vmem, size = 0x8000, scoped, tag = 'scratch operand']
  %s0 = inlined_call_operand.vmem [shape: f32[1,8,256], index: 0, kind: input, shape index: {}]
  %s1 = inlined_call_operand.vmem [shape: s32[1,256], index: 1, kind: input, shape index: {}]
  %s2 = inlined_call_operand.vmem [shape: f32[3,24,1], index: 2, kind: input, shape index: {}]
  %s3 = inlined_call_operand.vmem [shape: f32[3,24,1], index: 3, kind: input, shape index: {}]
  %s4 = inlined_call_operand.vmem [shape: f32[3,24,24], index: 4, kind: input, shape index: {}]
  %s5 = inlined_call_operand.vmem [shape: f32[3,8,1], index: 5, kind: input, shape index: {}]
  %s6 = inlined_call_operand.hbm [shape: f32[1,32,256], index: 6, kind: output, shape index: {}]
  %s7 = sld [smem:[#allocation0]]
  $region34: #{tpu_custom_call.1} parent=0
    _
  %s9 = ssub.s32 1, %s7
  %s10 = scalar_select 0, %s9, %s7
  $region1: #{tpu_custom_call.1} parent=0
    #allocation3 [shape = 'u8[32768]{0}', space=vmem, size = 0x8000, scoped, tag = 'output window, operand 0, single buffered']
    #allocation4 [shape = 's32[1]{0}', space=sflag, size = 0x4, scoped, tag = 'scoped memory for tpu_custom_call.1']
    %11 = vsyncpa [#allocation4], 0
    // Predicated region
    $region2: #{tpu_custom_call.1} parent=1 // pred_check
      _
    $region3: #{tpu_custom_call.1} parent=1 // pred_check_branch
      %13 = sbr.rel (0) target = $region5
    $region4: #{tpu_custom_call.1} parent=1 // pred_region
      _
    $region5: #{tpu_custom_call.1} parent=1 // pred_fallthru
      _
    // Predicated region
    $region6: #{tpu_custom_call.1} parent=1 // pred_check
      _
    $region7: #{tpu_custom_call.1} parent=1 // pred_check_branch
      %15 = sbr.rel (0) target = $region9
    $region8: #{tpu_custom_call.1} parent=1 // pred_region
      _
    $region9: #{tpu_custom_call.1} parent=1 // pred_fallthru
      _
    // Predicated region
    $region10: #{tpu_custom_call.1} parent=1 // pred_check
      _
    $region11: #{tpu_custom_call.1} parent=1 // pred_check_branch
      %17 = sbr.rel (0) target = $region13
    $region12: #{tpu_custom_call.1} parent=1 // pred_region
      _
    $region13: #{tpu_custom_call.1} parent=1 // pred_fallthru
      _
    // Predicated region
    $region14: #{tpu_custom_call.1} parent=1 // pred_check
      _
    $region15: #{tpu_custom_call.1} parent=1 // pred_check_branch
      %19 = sbr.rel (0) target = $region17
    $region16: #{tpu_custom_call.1} parent=1 // pred_region
      _
    $region17: #{tpu_custom_call.1} parent=1 // pred_fallthru
      _
    // Predicated region
    $region18: #{tpu_custom_call.1} parent=1 // pred_check
      _
    $region19: #{tpu_custom_call.1} parent=1 // pred_check_branch
      %21 = sbr.rel (0) target = $region21
    $region20: #{tpu_custom_call.1} parent=1 // pred_region
      _
    $region21: #{tpu_custom_call.1} parent=1 // pred_fallthru
      _
    // Predicated region
    $region22: #{tpu_custom_call.1} parent=1 // pred_check
      _
    $region23: #{tpu_custom_call.1} parent=1 // pred_check_branch
      %23 = sbr.rel (0) target = $region25
    $region24: #{tpu_custom_call.1} parent=1 // pred_region
      _
    $region25: #{tpu_custom_call.1} parent=1 // pred_fallthru
      _
    %v24 = vld [vmem:[%s1] sm:$0x3]
    %vm25 = vcmp.ge.s32.totalorder %v24, 1
    %v26 = vsel %vm25, 1, 0
    %v27 = vlaneseq
    %v28 = vshrl.u32 %v27, 7
    %v29 = vsub.s32 0, %v28
    %v30 = vrot.slane %v26, %v29
    %v31 = vlaneseq
    %v32 = vshrl.u32 %v31, 7
    %v33 = vsub.s32 1, %v32
    %v34 = vrot.slane %v26, %v33
    %vm35 = vcmp.eq.s32.totalorder %v30, 1
    %vm36 = vcmp.eq.s32.totalorder %v34, 1
    %vm37 = vcmp.le.s32.totalorder %v24, 14
    %v38 = vsel %vm37, 1, 0
    %v39 = vlaneseq
    %v40 = vshrl.u32 %v39, 7
    %v41 = vsub.s32 0, %v40
    %v42 = vrot.slane %v38, %v41
    %v43 = vlaneseq
    %v44 = vshrl.u32 %v43, 7
    %v45 = vsub.s32 1, %v44
    %v46 = vrot.slane %v38, %v45
    %vm47 = vcmp.eq.s32.totalorder %v42, 1
    %vm48 = vcmp.eq.s32.totalorder %v46, 1
    %vm49 = vcmp.lt.s32.totalorder %v24, 16
    %v50 = vsel %vm49, 1, 0
    %v51 = vlaneseq
    %v52 = vshrl.u32 %v51, 7
    %v53 = vsub.s32 0, %v52
    %v54 = vrot.slane %v50, %v53
    %v55 = vlaneseq
    %v56 = vshrl.u32 %v55, 7
    %v57 = vsub.s32 1, %v56
    %v58 = vrot.slane %v50, %v57
    %vm59 = vcmp.eq.s32.totalorder %v54, 1
    %vm60 = vcmp.eq.s32.totalorder %v58, 1
    %v61 = vld [vmem:[%s0] sm:$0xff]
    %v62 = vld [vmem:[%s0 + $0x8] sm:$0xff]
    %63 = vst [vmem:[#allocation2] sm:$0xff] %v61
    %64 = vst [vmem:[#allocation2 + $0x8] sm:$0xff] %v62
    %65 = vst [vmem:[#allocation3] sm:$0xff] %v61
    %66 = vst [vmem:[#allocation3 + $0x8] sm:$0xff] %v62
    %v67 = vld [vmem:[%s2] sm:$0xff]
    %v68 = vld [vmem:[%s3] sm:$0xff]
    %v69 = vld [vmem:[%s4] sm:$0xff]
    %v70 = vld [vmem:[%s4 + $0x8] sm:$0xff]
    %v71 = vld [vmem:[%s4 + $0x10] sm:$0xff]
    %v72 = vld [vmem:[%s5] sm:$0xff]
    %v73 = vld [vmem:[#allocation2] sm:$0xff]
    %v74 = vld [vmem:[#allocation2 + $0x8] sm:$0xff]
    %76 = vset.pattern.permute.xlu0 0
    %77 = vperm.xlu0 %76, %v67
    %v78 = vpop.permute.xlu0 %77
    %v80 = vmul.f32 %v73, %v78
    %v81 = vmul.f32 %v74, %v78
    %83 = vset.pattern.permute.xlu0 0
    %84 = vperm.xlu0 %83, %v68
    %v85 = vpop.permute.xlu0 %84
    %v87 = vadd.f32 %v80, %v85
    %v88 = vadd.f32 %v81, %v85
    %v89 = vmax.f32 %v87, 0.0
    %v90 = vmax.f32 %v88, 0.0
    %vm91 = vcmask 64512
    %v93 = vsel %vm91, %v69, 0
    %v96 = vsel %vm91, %v70, 0
    %v99 = vsel %vm91, %v71, 0
    %101 = vmatprep.subr.mxu0 %v90
    %102 = vmatpush1.msra.mxu0 %v89
    %103 = vmatprep.subr.mxu0 0.0
    %104 = vmatpush1.msra.mxu0 0.0
    %105 = vmatprep.subr.mxu0 0.0
    %106 = vmatpush1.msra.mxu0 0.0
    %107 = vmatprep.subr.mxu0 0.0
    %108 = vmatpush1.msra.mxu0 0.0
    %109 = vmatprep.subr.mxu0 0.0
    %110 = vmatpush1.msra.mxu0 0.0
    %111 = vmatprep.subr.mxu0 0.0
    %112 = vmatpush1.msra.mxu0 0.0
    %113 = vmatprep.subr.mxu0 0.0
    %114 = vmatpush1.msra.mxu0 0.0
    %115 = vmatprep.subr.mxu0 0.0
    %116 = vmatpush1.msra.mxu0 0.0
    %117 = vmatprep.subr.mxu0 0.0
    %118 = vmatpush1.msra.mxu0 0.0
    %119 = vmatprep.subr.mxu0 0.0
    %120 = vmatpush1.msra.mxu0 0.0
    %121 = vmatprep.subr.mxu0 0.0
    %122 = vmatpush1.msra.mxu0 0.0
    %123 = vmatprep.subr.mxu0 0.0
    %124 = vmatpush1.msra.mxu0 0.0
    %125 = vmatprep.subr.mxu0 0.0
    %126 = vmatpush1.msra.mxu0 0.0
    %127 = vmatprep.subr.mxu0 0.0
    %128 = vmatpush1.msra.mxu0 0.0
    %129 = vmatprep.subr.mxu0 0.0
    %130 = vmatpush1.msra.mxu0 0.0
    %131 = vmatprep.subr.mxu0 0.0
    %132 = vmatpush1.msra.mxu0 0.0
    %133 = vmatprep.subr.mxu0 0.0
    %134 = vmatpush1.msra.mxu0 0.0
    %135 = vmatprep.subr.mxu0 0.0
    %136 = vmatpush1.msra.mxu0 0.0
    %137 = vmatprep.subr.mxu0 0.0
    %138 = vmatpush1.msra.mxu0 0.0
    %139 = vmatprep.subr.mxu0 0.0
    %140 = vmatpush1.msra.mxu0 0.0
    %141 = vmatprep.subr.mxu0 0.0
    %142 = vmatpush1.msra.mxu0 0.0
    %143 = vmatprep.subr.mxu0 0.0
    %144 = vmatpush1.msra.mxu0 0.0
    %145 = vmatprep.subr.mxu0 0.0
    %146 = vmatpush1.msra.mxu0 0.0
    %147 = vmatprep.subr.mxu0 0.0
    %148 = vmatpush1.msra.mxu0 0.0
    %149 = vmatprep.subr.mxu0 0.0
    %150 = vmatpush1.msra.mxu0 0.0
    %151 = vmatprep.subr.mxu0 0.0
    %152 = vmatpush1.msra.mxu0 0.0
    %153 = vmatprep.subr.mxu0 0.0
    %154 = vmatpush1.msra.mxu0 0.0
    %155 = vmatprep.subr.mxu0 0.0
    %156 = vmatpush1.msra.mxu0 0.0
    %157 = vmatprep.subr.mxu0 0.0
    %158 = vmatpush1.msra.mxu0 0.0
    %159 = vmatprep.subr.mxu0 0.0
    %160 = vmatpush1.msra.mxu0 0.0
    %161 = vmatprep.subr.mxu0 0.0
    %162 = vmatpush1.msra.mxu0 0.0
    %163 = vmatprep.subr.mxu0 0.0
    %164 = vmatpush1.msra.mxu0 0.0
    %165 = vmatprep.mubr.f32.mxu0 0.0
    %166 = vmatmul.mubr.f32.gmra.mrb[0].mxu0 %v93
    %v167 = vpop.f32.mrb[0].mxu0
    %v168 = vadd.f32 0.0, %v167
    %v169 = vpop.f32.mrb[0].mxu0
    %v170 = vadd.f32 0.0, %v169
    %171 = vmatprep.mubr.f32.mxu0 0.0
    %172 = vmatmul.mubr.f32.gmra.mrb[0].mxu0 %v96
    %v173 = vpop.f32.mrb[0].mxu0
    %v174 = vadd.f32 0.0, %v173
    %v175 = vpop.f32.mrb[0].mxu0
    %v176 = vadd.f32 0.0, %v175
    %177 = vmatprep.mubr.f32.mxu0 0.0
    %178 = vmatmul.mubr.f32.gmra.mrb[0].mxu0 %v99
    %v179 = vpop.f32.mrb[0].mxu0
    %v180 = vadd.f32 0.0, %v179
    %v181 = vpop.f32.mrb[0].mxu0
    %v182 = vadd.f32 0.0, %v181
    %183 = vdwg.mxu0
    %184 = vrot.lane.b32.xlu0 %v168, 1
    %v185 = vpop.permute.xlu0 %184
    %186 = vrot.lane.b32.xlu0 %v170, 1
    %v187 = vpop.permute.xlu0 %186
    %v188 = vlaneseq
    %v189 = vand.u32 %v188, 127
    %vm190 = vcmp.lt.s32.totalorder %v189, 1
    %v191 = vsel %vm190, %v185, %v187
    %v192 = vsel %vm190, %v187, %v185
    %v193 = vsel %vm35, %v192, 0.0
    %v194 = vsel %vm36, %v191, 0.0
    %195 = vrot.lane.b32.xlu0 %v180, 127
    %v196 = vpop.permute.xlu0 %195
    %197 = vrot.lane.b32.xlu0 %v182, 127
    %v198 = vpop.permute.xlu0 %197
    %vm199 = vcmp.lt.s32.totalorder %v189, 127
    %v200 = vsel %vm199, %v196, %v198
    %v201 = vsel %vm199, %v198, %v196
    %v202 = vsel %vm47, %v200, 0.0
    %v203 = vsel %vm48, %v201, 0.0
    %v204 = vadd.f32 %v174, %v193
    %v205 = vadd.f32 %v176, %v194
    %v206 = vadd.f32 %v204, %v202
    %v207 = vadd.f32 %v205, %v203
    %209 = vset.pattern.permute.xlu0 0
    %210 = vperm.xlu0 %209, %v72
    %v211 = vpop.permute.xlu0 %210
    %v213 = vadd.f32 %v206, %v211
    %v214 = vadd.f32 %v207, %v211
    %v215 = vsel %vm59, %v213, 0.0
    %v216 = vsel %vm60, %v214, 0.0
    %217 = vst [vmem:[#allocation2 + $0x10] sm:$0xff] %v215
    %218 = vst [vmem:[#allocation2 + $0x18] sm:$0xff] %v216
    %219 = vst [vmem:[#allocation3 + $0x10] sm:$0xff] %v215
    %220 = vst [vmem:[#allocation3 + $0x18] sm:$0xff] %v216
    %s221 = scalar_lea.vmem %s2, 24
    %v222 = vld [vmem:[%s221] sm:$0xff]
    %v223 = vld [vmem:[%s221 + $0x8] sm:$0xff]
    %s224 = scalar_lea.vmem %s3, 24
    %v225 = vld [vmem:[%s224] sm:$0xff]
    %v226 = vld [vmem:[%s224 + $0x8] sm:$0xff]
    %s227 = scalar_lea.vmem %s4, 24
    %v228 = vld [vmem:[%s227] sm:$0xff]
    %v229 = vld [vmem:[%s227 + $0x8] sm:$0xff]
    %v230 = vld [vmem:[%s227 + $0x10] sm:$0xff]
    %s231 = scalar_lea.vmem %s5, 8
    %v232 = vld [vmem:[%s231] sm:$0xff]
    %v233 = vld [vmem:[#allocation2] sm:$0xff]
    %v234 = vld [vmem:[#allocation2 + $0x8] sm:$0xff]
    %v235 = vld [vmem:[#allocation2 + $0x10] sm:$0xff]
    %v236 = vld [vmem:[#allocation2 + $0x18] sm:$0xff]
    %238 = vset.pattern.permute.xlu0 0
    %239 = vperm.xlu0 %238, %v222
    %v240 = vpop.permute.xlu0 %239
    %243 = vset.pattern.permute.xlu0 0
    %244 = vperm.xlu0 %243, %v223
    %v245 = vpop.permute.xlu0 %244
    %v247 = vmul.f32 %v233, %v240
    %v248 = vmul.f32 %v234, %v240
    %v249 = vmul.f32 %v235, %v245
    %v250 = vmul.f32 %v236, %v245
    %252 = vset.pattern.permute.xlu0 0
    %253 = vperm.xlu0 %252, %v225
    %v254 = vpop.permute.xlu0 %253
    %257 = vset.pattern.permute.xlu0 0
    %258 = vperm.xlu0 %257, %v226
    %v259 = vpop.permute.xlu0 %258
    %v261 = vadd.f32 %v247, %v254
    %v262 = vadd.f32 %v248, %v254
    %v263 = vadd.f32 %v249, %v259
    %v264 = vadd.f32 %v250, %v259
    %v265 = vmax.f32 %v261, 0.0
    %v266 = vmax.f32 %v262, 0.0
    %v267 = vmax.f32 %v263, 0.0
    %v268 = vmax.f32 %v264, 0.0
    %vm269 = vcmask 130048
    %v271 = vsel %vm269, %v228, 0
    %v274 = vsel %vm269, %v229, 0
    %v277 = vsel %vm269, %v230, 0
    %279 = vmatprep.subr.mxu0 %v266
    %280 = vmatpush1.msra.mxu0 %v265
    %281 = vmatprep.subr.mxu0 %v268
    %282 = vmatpush1.msra.mxu0 %v267
    %283 = vmatprep.subr.mxu0 0.0
    %284 = vmatpush1.msra.mxu0 0.0
    %285 = vmatprep.subr.mxu0 0.0
    %286 = vmatpush1.msra.mxu0 0.0
    %287 = vmatprep.subr.mxu0 0.0
    %288 = vmatpush1.msra.mxu0 0.0
    %289 = vmatprep.subr.mxu0 0.0
    %290 = vmatpush1.msra.mxu0 0.0
    %291 = vmatprep.subr.mxu0 0.0
    %292 = vmatpush1.msra.mxu0 0.0
    %293 = vmatprep.subr.mxu0 0.0
    %294 = vmatpush1.msra.mxu0 0.0
    %295 = vmatprep.subr.mxu0 0.0
    %296 = vmatpush1.msra.mxu0 0.0
    %297 = vmatprep.subr.mxu0 0.0
    %298 = vmatpush1.msra.mxu0 0.0
    %299 = vmatprep.subr.mxu0 0.0
    %300 = vmatpush1.msra.mxu0 0.0
    %301 = vmatprep.subr.mxu0 0.0
    %302 = vmatpush1.msra.mxu0 0.0
    %303 = vmatprep.subr.mxu0 0.0
    %304 = vmatpush1.msra.mxu0 0.0
    %305 = vmatprep.subr.mxu0 0.0
    %306 = vmatpush1.msra.mxu0 0.0
    %307 = vmatprep.subr.mxu0 0.0
    %308 = vmatpush1.msra.mxu0 0.0
    %309 = vmatprep.subr.mxu0 0.0
    %310 = vmatpush1.msra.mxu0 0.0
    %311 = vmatprep.subr.mxu0 0.0
    %312 = vmatpush1.msra.mxu0 0.0
    %313 = vmatprep.subr.mxu0 0.0
    %314 = vmatpush1.msra.mxu0 0.0
    %315 = vmatprep.subr.mxu0 0.0
    %316 = vmatpush1.msra.mxu0 0.0
    %317 = vmatprep.subr.mxu0 0.0
    %318 = vmatpush1.msra.mxu0 0.0
    %319 = vmatprep.subr.mxu0 0.0
    %320 = vmatpush1.msra.mxu0 0.0
    %321 = vmatprep.subr.mxu0 0.0
    %322 = vmatpush1.msra.mxu0 0.0
    %323 = vmatprep.subr.mxu0 0.0
    %324 = vmatpush1.msra.mxu0 0.0
    %325 = vmatprep.subr.mxu0 0.0
    %326 = vmatpush1.msra.mxu0 0.0
    %327 = vmatprep.subr.mxu0 0.0
    %328 = vmatpush1.msra.mxu0 0.0
    %329 = vmatprep.subr.mxu0 0.0
    %330 = vmatpush1.msra.mxu0 0.0
    %331 = vmatprep.subr.mxu0 0.0
    %332 = vmatpush1.msra.mxu0 0.0
    %333 = vmatprep.subr.mxu0 0.0
    %334 = vmatpush1.msra.mxu0 0.0
    %335 = vmatprep.subr.mxu0 0.0
    %336 = vmatpush1.msra.mxu0 0.0
    %337 = vmatprep.subr.mxu0 0.0
    %338 = vmatpush1.msra.mxu0 0.0
    %339 = vmatprep.subr.mxu0 0.0
    %340 = vmatpush1.msra.mxu0 0.0
    %341 = vmatprep.subr.mxu0 0.0
    %342 = vmatpush1.msra.mxu0 0.0
    %343 = vmatprep.mubr.f32.mxu0 0.0
    %344 = vmatmul.mubr.f32.gmra.mrb[0].mxu0 %v271
    %v345 = vpop.f32.mrb[0].mxu0
    %v346 = vadd.f32 0.0, %v345
    %v347 = vpop.f32.mrb[0].mxu0
    %v348 = vadd.f32 0.0, %v347
    %349 = vmatprep.mubr.f32.mxu0 0.0
    %350 = vmatmul.mubr.f32.gmra.mrb[0].mxu0 %v274
    %v351 = vpop.f32.mrb[0].mxu0
    %v352 = vadd.f32 0.0, %v351
    %v353 = vpop.f32.mrb[0].mxu0
    %v354 = vadd.f32 0.0, %v353
    %355 = vmatprep.mubr.f32.mxu0 0.0
    %356 = vmatmul.mubr.f32.gmra.mrb[0].mxu0 %v277
    %v357 = vpop.f32.mrb[0].mxu0
    %v358 = vadd.f32 0.0, %v357
    %v359 = vpop.f32.mrb[0].mxu0
    %v360 = vadd.f32 0.0, %v359
    %361 = vdwg.mxu0
    %362 = vrot.lane.b32.xlu0 %v346, 1
    %v363 = vpop.permute.xlu0 %362
    %364 = vrot.lane.b32.xlu0 %v348, 1
    %v365 = vpop.permute.xlu0 %364
    %v366 = vsel %vm190, %v363, %v365
    %v367 = vsel %vm190, %v365, %v363
    %v368 = vsel %vm35, %v367, 0.0
    %v369 = vsel %vm36, %v366, 0.0
    %370 = vrot.lane.b32.xlu0 %v358, 127
    %v371 = vpop.permute.xlu0 %370
    %372 = vrot.lane.b32.xlu0 %v360, 127
    %v373 = vpop.permute.xlu0 %372
    %v374 = vsel %vm199, %v371, %v373
    %v375 = vsel %vm199, %v373, %v371
    %v376 = vsel %vm47, %v374, 0.0
    %v377 = vsel %vm48, %v375, 0.0
    %v378 = vadd.f32 %v352, %v368
    %v379 = vadd.f32 %v354, %v369
    %v380 = vadd.f32 %v378, %v376
    %v381 = vadd.f32 %v379, %v377
    %383 = vset.pattern.permute.xlu0 0
    %384 = vperm.xlu0 %383, %v232
    %v385 = vpop.permute.xlu0 %384
    %v387 = vadd.f32 %v380, %v385
    %v388 = vadd.f32 %v381, %v385
    %v389 = vsel %vm59, %v387, 0.0
    %v390 = vsel %vm60, %v388, 0.0
    %391 = vst [vmem:[#allocation2 + $0x20] sm:$0xff] %v389
    %392 = vst [vmem:[#allocation2 + $0x28] sm:$0xff] %v390
    %393 = vst [vmem:[#allocation3 + $0x20] sm:$0xff] %v389
    %394 = vst [vmem:[#allocation3 + $0x28] sm:$0xff] %v390
    %s395 = scalar_lea.vmem %s2, 48
    %v396 = vld [vmem:[%s395] sm:$0xff]
    %v397 = vld [vmem:[%s395 + $0x8] sm:$0xff]
    %v398 = vld [vmem:[%s395 + $0x10] sm:$0xff]
    %s399 = scalar_lea.vmem %s3, 48
    %v400 = vld [vmem:[%s399] sm:$0xff]
    %v401 = vld [vmem:[%s399 + $0x8] sm:$0xff]
    %v402 = vld [vmem:[%s399 + $0x10] sm:$0xff]
    %s403 = scalar_lea.vmem %s4, 48
    %v404 = vld [vmem:[%s403] sm:$0xff]
    %v405 = vld [vmem:[%s403 + $0x8] sm:$0xff]
    %v406 = vld [vmem:[%s403 + $0x10] sm:$0xff]
    %s407 = scalar_lea.vmem %s5, 16
    %v408 = vld [vmem:[%s407] sm:$0xff]
    %v409 = vld [vmem:[#allocation2] sm:$0xff]
    %v410 = vld [vmem:[#allocation2 + $0x8] sm:$0xff]
    %v411 = vld [vmem:[#allocation2 + $0x10] sm:$0xff]
    %v412 = vld [vmem:[#allocation2 + $0x18] sm:$0xff]
    %v413 = vld [vmem:[#allocation2 + $0x20] sm:$0xff]
    %v414 = vld [vmem:[#allocation2 + $0x28] sm:$0xff]
    %416 = vset.pattern.permute.xlu0 0
    %417 = vperm.xlu0 %416, %v396
    %v418 = vpop.permute.xlu0 %417
    %421 = vset.pattern.permute.xlu0 0
    %422 = vperm.xlu0 %421, %v397
    %v423 = vpop.permute.xlu0 %422
    %426 = vset.pattern.permute.xlu0 0
    %427 = vperm.xlu0 %426, %v398
    %v428 = vpop.permute.xlu0 %427
    %v430 = vmul.f32 %v409, %v418
    %v431 = vmul.f32 %v410, %v418
    %v432 = vmul.f32 %v411, %v423
    %v433 = vmul.f32 %v412, %v423
    %v434 = vmul.f32 %v413, %v428
    %v435 = vmul.f32 %v414, %v428
    %437 = vset.pattern.permute.xlu0 0
    %438 = vperm.xlu0 %437, %v400
    %v439 = vpop.permute.xlu0 %438
    %442 = vset.pattern.permute.xlu0 0
    %443 = vperm.xlu0 %442, %v401
    %v444 = vpop.permute.xlu0 %443
    %447 = vset.pattern.permute.xlu0 0
    %448 = vperm.xlu0 %447, %v402
    %v449 = vpop.permute.xlu0 %448
    %v451 = vadd.f32 %v430, %v439
    %v452 = vadd.f32 %v431, %v439
    %v453 = vadd.f32 %v432, %v444
    %v454 = vadd.f32 %v433, %v444
    %v455 = vadd.f32 %v434, %v449
    %v456 = vadd.f32 %v435, %v449
    %v457 = vmax.f32 %v451, 0.0
    %v458 = vmax.f32 %v452, 0.0
    %v459 = vmax.f32 %v453, 0.0
    %v460 = vmax.f32 %v454, 0.0
    %v461 = vmax.f32 %v455, 0.0
    %v462 = vmax.f32 %v456, 0.0
    %vm463 = vcmask 195584
    %v465 = vsel %vm463, %v404, 0
    %v468 = vsel %vm463, %v405, 0
    %v471 = vsel %vm463, %v406, 0
    %473 = vmatprep.subr.mxu0 %v458
    %474 = vmatpush1.msra.mxu0 %v457
    %475 = vmatprep.subr.mxu0 %v460
    %476 = vmatpush1.msra.mxu0 %v459
    %477 = vmatprep.subr.mxu0 %v462
    %478 = vmatpush1.msra.mxu0 %v461
    %479 = vmatprep.subr.mxu0 0.0
    %480 = vmatpush1.msra.mxu0 0.0
    %481 = vmatprep.subr.mxu0 0.0
    %482 = vmatpush1.msra.mxu0 0.0
    %483 = vmatprep.subr.mxu0 0.0
    %484 = vmatpush1.msra.mxu0 0.0
    %485 = vmatprep.subr.mxu0 0.0
    %486 = vmatpush1.msra.mxu0 0.0
    %487 = vmatprep.subr.mxu0 0.0
    %488 = vmatpush1.msra.mxu0 0.0
    %489 = vmatprep.subr.mxu0 0.0
    %490 = vmatpush1.msra.mxu0 0.0
    %491 = vmatprep.subr.mxu0 0.0
    %492 = vmatpush1.msra.mxu0 0.0
    %493 = vmatprep.subr.mxu0 0.0
    %494 = vmatpush1.msra.mxu0 0.0
    %495 = vmatprep.subr.mxu0 0.0
    %496 = vmatpush1.msra.mxu0 0.0
    %497 = vmatprep.subr.mxu0 0.0
    %498 = vmatpush1.msra.mxu0 0.0
    %499 = vmatprep.subr.mxu0 0.0
    %500 = vmatpush1.msra.mxu0 0.0
    %501 = vmatprep.subr.mxu0 0.0
    %502 = vmatpush1.msra.mxu0 0.0
    %503 = vmatprep.subr.mxu0 0.0
    %504 = vmatpush1.msra.mxu0 0.0
    %505 = vmatprep.subr.mxu0 0.0
    %506 = vmatpush1.msra.mxu0 0.0
    %507 = vmatprep.subr.mxu0 0.0
    %508 = vmatpush1.msra.mxu0 0.0
    %509 = vmatprep.subr.mxu0 0.0
    %510 = vmatpush1.msra.mxu0 0.0
    %511 = vmatprep.subr.mxu0 0.0
    %512 = vmatpush1.msra.mxu0 0.0
    %513 = vmatprep.subr.mxu0 0.0
    %514 = vmatpush1.msra.mxu0 0.0
    %515 = vmatprep.subr.mxu0 0.0
    %516 = vmatpush1.msra.mxu0 0.0
    %517 = vmatprep.subr.mxu0 0.0
    %518 = vmatpush1.msra.mxu0 0.0
    %519 = vmatprep.subr.mxu0 0.0
    %520 = vmatpush1.msra.mxu0 0.0
    %521 = vmatprep.subr.mxu0 0.0
    %522 = vmatpush1.msra.mxu0 0.0
    %523 = vmatprep.subr.mxu0 0.0
    %524 = vmatpush1.msra.mxu0 0.0
    %525 = vmatprep.subr.mxu0 0.0
    %526 = vmatpush1.msra.mxu0 0.0
    %527 = vmatprep.subr.mxu0 0.0
    %528 = vmatpush1.msra.mxu0 0.0
    %529 = vmatprep.subr.mxu0 0.0
    %530 = vmatpush1.msra.mxu0 0.0
    %531 = vmatprep.subr.mxu0 0.0
    %532 = vmatpush1.msra.mxu0 0.0
    %533 = vmatprep.subr.mxu0 0.0
    %534 = vmatpush1.msra.mxu0 0.0
    %535 = vmatprep.subr.mxu0 0.0
    %536 = vmatpush1.msra.mxu0 0.0
    %537 = vmatprep.mubr.f32.mxu0 0.0
    %538 = vmatmul.mubr.f32.gmra.mrb[0].mxu0 %v465
    %v539 = vpop.f32.mrb[0].mxu0
    %v540 = vadd.f32 0.0, %v539
    %v541 = vpop.f32.mrb[0].mxu0
    %v542 = vadd.f32 0.0, %v541
    %543 = vmatprep.mubr.f32.mxu0 0.0
    %544 = vmatmul.mubr.f32.gmra.mrb[0].mxu0 %v468
    %v545 = vpop.f32.mrb[0].mxu0
    %v546 = vadd.f32 0.0, %v545
    %v547 = vpop.f32.mrb[0].mxu0
    %v548 = vadd.f32 0.0, %v547
    %549 = vmatprep.mubr.f32.mxu0 0.0
    %550 = vmatmul.mubr.f32.gmra.mrb[0].mxu0 %v471
    %v551 = vpop.f32.mrb[0].mxu0
    %v552 = vadd.f32 0.0, %v551
    %v553 = vpop.f32.mrb[0].mxu0
    %v554 = vadd.f32 0.0, %v553
    %555 = vdwg.mxu0
    %556 = vrot.lane.b32.xlu0 %v540, 1
    %v557 = vpop.permute.xlu0 %556
    %558 = vrot.lane.b32.xlu0 %v542, 1
    %v559 = vpop.permute.xlu0 %558
    %v560 = vsel %vm190, %v557, %v559
    %v561 = vsel %vm190, %v559, %v557
    %v562 = vsel %vm35, %v561, 0.0
    %v563 = vsel %vm36, %v560, 0.0
    %564 = vrot.lane.b32.xlu0 %v552, 127
    %v565 = vpop.permute.xlu0 %564
    %566 = vrot.lane.b32.xlu0 %v554, 127
    %v567 = vpop.permute.xlu0 %566
    %v568 = vsel %vm199, %v565, %v567
    %v569 = vsel %vm199, %v567, %v565
    %v570 = vsel %vm47, %v568, 0.0
    %v571 = vsel %vm48, %v569, 0.0
    %v572 = vadd.f32 %v546, %v562
    %v573 = vadd.f32 %v548, %v563
    %v574 = vadd.f32 %v572, %v570
    %v575 = vadd.f32 %v573, %v571
    %577 = vset.pattern.permute.xlu0 0
    %578 = vperm.xlu0 %577, %v408
    %v579 = vpop.permute.xlu0 %578
    %v581 = vadd.f32 %v574, %v579
    %v582 = vadd.f32 %v575, %v579
    %v583 = vsel %vm59, %v581, 0.0
    %v584 = vsel %vm60, %v582, 0.0
    %585 = vst [vmem:[#allocation2 + $0x30] sm:$0xff] %v583
    %586 = vst [vmem:[#allocation2 + $0x38] sm:$0xff] %v584
    %587 = vst [vmem:[#allocation3 + $0x30] sm:$0xff] %v583
    %588 = vst [vmem:[#allocation3 + $0x38] sm:$0xff] %v584
    // Predicated region
    $region26: #{tpu_custom_call.1} parent=1 // pred_check
      _
    $region27: #{tpu_custom_call.1} parent=1 // pred_check_branch
      %590 = sbr.rel (0) target = $region29
    $region28: #{tpu_custom_call.1} parent=1 // pred_region
      %s592 = ssub.s32 1024, 1024
      %593 = vsyncadd [#allocation4], %s592
      %s594 = sshll.u32 [#allocation3], 4
      %s595 = int_to_ptr.vmem [resolvable:$true] %s594
      %600 = dma.vmem_to_hbm [thread:$0]  %s595, 1024, %s6, [#allocation4], 256, 256, 16
    $region29: #{tpu_custom_call.1} parent=1 // pred_fallthru
      _
    // Predicated region
    $region30: #{tpu_custom_call.1} parent=1 // pred_check
      _
    $region31: #{tpu_custom_call.1} parent=1 // pred_check_branch
      %602 = sbr.rel (0) target = $region33
    $region32: #{tpu_custom_call.1} parent=1 // pred_region
      %603 = dma.done [#allocation4], 1024
    $region33: #{tpu_custom_call.1} parent=1 // pred_fallthru
      _
    %604 = vsyncpa [#allocation4], 1

</llo_original>
